<compile_context>
chip_gen: v6e
topology: v6e:2x2x1
jax: 0.10.0
libtpu: 0.0.40
codegen_flags: <defaults>
</compile_context>

<pallas_src>
from functools import partial

import jax
import jax.numpy as jnp
from jax.experimental import pallas as pl
from jax.experimental.pallas import tpu as pltpu

_LANE = 128
_MIB = 1024 * 1024
# Lane-dense slab width candidates (widest first) for 128-aligned sizes.
_WIDTHS = (2048, 1024, 512, 256, 128)


def _round_up(x: int, m: int) -> int:
    return ((x + m - 1) // m) * m


def _sublane_multiple(dtype) -> int:
    # (8,128) f32 vreg tile; sub-32-bit dtypes pack along sublanes
    # (bf16 -> 16 rows, int8/fp8 -> 32 rows).
    itemsize = jnp.dtype(dtype).itemsize
    return max(8, 32 // max(itemsize, 1))


def _hw_params():
    """Generation-aware tiling knobs; conservative (v7x-safe) defaults."""
    vmem_cap = 64 * _MIB          # v7x per-TC VMEM; v5e/v6e have 128 MiB
    single_tc = False             # v7x has 2 TCs/chip; v5e/v6e have 1
    try:
        vmem_cap = int(pltpu.get_tpu_info().vmem_capacity_bytes)
    except Exception:
        pass
    try:
        kind = jax.devices()[0].device_kind.lower()
        single_tc = any(t in kind for t in ("v5 lite", "v5e", "v6 lite", "v6e"))
    except Exception:
        pass
    big_vmem = vmem_cap >= 96 * _MIB
    return {
        "vmem_cap": vmem_cap,
        # Per-block byte budget: 8 MiB on 128 MiB-VMEM parts, 6 MiB on v7x.
        "block_bytes": 8 * _MIB if big_vmem else 6 * _MIB,
        # Minimum grid steps once tiling: 2x TensorCore count.
        "min_grid": 2 if single_tc else 4,
        # Below this slab size, one whole-array block (no grid) on 1-TC chips;
        # on 2-TC chips tile earlier so both cores get work and DMAs overlap.
        "single_block_bytes": 2 * _MIB if single_tc else 1 * _MIB,
    }


def _lambda_kernel(func, x_ref, o_ref):
    # Elementwise fast path: `func` is traced straight into the kernel body
    # and runs on the VPU/EUP over the current VMEM block.
    o_ref[...] = func(x_ref[...]).astype(o_ref.dtype)


class PallasLambda:
    """JAX/Pallas equivalent of the PyTorch `Lambda` module.

    Contract: the wrapped `func` is assumed *elementwise* (shape preserving,
    no cross-element dependence); it is traced into a Pallas kernel and
    executed block-by-block on-chip.  Funcs that change the output shape
    (e.g. ``x.view(B, -1)``) are data movement only and run as plain JAX.
    # TODO(synk): shape-preserving but non-elementwise funcs (softmax,
    # x - x.mean(), ...) pass the abstract-shape probes and would be computed
    # per block (wrong values, no error); this is a documented contract.
    """

    def __init__(self, func):
        self.func = func
        self._hw = _hw_params()

    # ------------------------------------------------------------------ #
    # helpers
    # ------------------------------------------------------------------ #
    def _probe_shape_ok(self, shape, dtype):
        """True iff `func` traces on `shape` and preserves it (block safety)."""
        try:
            o = jax.eval_shape(self.func, jax.ShapeDtypeStruct(tuple(shape), dtype))
        except Exception:
            return False
        return o.shape == tuple(shape)

    def _vmem_limit(self, live_bytes):
        # ~1.5x the live (double-buffered in+out) bytes + fixed headroom,
        # floored at 40 MiB and capped well below physical VMEM.
        cap = max(40 * _MIB, min(self._hw["vmem_cap"] - 8 * _MIB, 100 * _MIB))
        want = int(1.5 * live_bytes) + 4 * _MIB
        return int(min(cap, max(40 * _MIB, want)))

    def _cost(self, total, in_item, out_item):
        # Advisory scheduling hint: a couple of VPU ops + one transcendental
        # per element is representative of activation-style lambdas.
        return pl.CostEstimate(
            flops=2 * total,
            transcendentals=total,
            bytes_accessed=total * (in_item + out_item),
        )

    # ------------------------------------------------------------------ #
    # paths
    # ------------------------------------------------------------------ #
    def _run_2d(self, x, flat, total, out_dtype, in_item, out_item):
        """128-aligned sizes: lane-dense 2-D slab, no padding needed."""
        hw = self._hw
        itemsize = max(in_item, out_item)
        sub_mult = max(_sublane_multiple(x.dtype), _sublane_multiple(out_dtype))

        width = next(w for w in _WIDTHS if total % w == 0)
        rows = total // width
        slab_bytes = total * itemsize
        x2d = flat.reshape(rows, width)          # free for contiguous arrays
        kernel = partial(_lambda_kernel, self.func)
        cost = self._cost(total, in_item, out_item)

        if slab_bytes <= hw["single_block_bytes"] or rows <= sub_mult:
            # Small slab: single whole-array block, no per-grid-step overhead.
            if not self._probe_shape_ok((rows, width), x.dtype):
                return self.func(x)              # shape-sensitive func
            out2d = pl.pallas_call(
                kernel,
                out_shape=jax.ShapeDtypeStruct((rows, width), out_dtype),
                compiler_params=pltpu.CompilerParams(
                    vmem_limit_bytes=self._vmem_limit(total * (in_item + out_item))
                ),
                cost_estimate=cost,
            )(x2d)
            return out2d.reshape(x.shape)

        budget_rows = max(
            sub_mult,
            (hw["block_bytes"] // (width * itemsize)) // sub_mult * sub_mult,
        )
        # Keep >= min_grid steps so (on v7x) both TensorCores get work and the
        # in/out DMAs pipeline across steps; only 2 steps forced on 1-TC chips.
        target_rows = max(sub_mult, _round_up(pl.cdiv(rows, hw["min_grid"]), sub_mult))
        block_rows = max(sub_mult, min(budget_rows, target_rows))
        grid = (pl.cdiv(rows, block_rows),)      # ragged last block is masked

        if not self._probe_shape_ok((block_rows, width), x.dtype):
            return self.func(x)

        live = 2 * block_rows * width * (in_item + out_item)  # double-buffered
        # TODO(synk): input_output_aliases={0: 0} would drop the second HBM
        # buffer when out_dtype == x.dtype AND the caller donates the input,
        # but risks a defensive copy otherwise, so it is not enabled here.
        out2d = pl.pallas_call(
            kernel,
            out_shape=jax.ShapeDtypeStruct((rows, width), out_dtype),
            grid_spec=pltpu.PrefetchScalarGridSpec(
                num_scalar_prefetch=0,
                grid=grid,
                in_specs=[pl.BlockSpec((block_rows, width), lambda i: (i, 0))],
                out_specs=pl.BlockSpec((block_rows, width), lambda i: (i, 0)),
            ),
            compiler_params=pltpu.CompilerParams(
                dimension_semantics=("parallel",),
                vmem_limit_bytes=self._vmem_limit(live),
            ),
            cost_estimate=cost,
        )(x2d)
        return out2d.reshape(x.shape)

    def _run_1d(self, x, flat, total, out_dtype, in_item, out_item):
        """Unaligned sizes: flat 1-D kernel, no jnp.pad / trailing slice."""
        hw = self._hw
        itemsize = max(in_item, out_item)
        kernel = partial(_lambda_kernel, self.func)
        cost = self._cost(total, in_item, out_item)

        if total * itemsize <= hw["single_block_bytes"]:
            # Single whole-array block: block shape == array shape, so the
            # 128-alignment rule does not apply and nothing needs masking.
            if not self._probe_shape_ok((total,), x.dtype):
                return self.func(x)
            out_flat = pl.pallas_call(
                kernel,
                out_shape=jax.ShapeDtypeStruct((total,), out_dtype),
                compiler_params=pltpu.CompilerParams(
                    vmem_limit_bytes=self._vmem_limit(total * (in_item + out_item))
                ),
                cost_estimate=cost,
            )(flat)
            return out_flat.reshape(x.shape)

        # Tiled 1-D: blocks are a multiple of 4096 elements (whole vregs for
        # every packing) and ~1 MiB logical.  The ragged final block is
        # handled by Pallas (clamped input DMA, out-of-bounds writes dropped),
        # so there is no padded HBM copy of the input and no output slice.
        blk = max(4096, (_MIB // itemsize) // 4096 * 4096)
        grid = (pl.cdiv(total, blk),)
        if not self._probe_shape_ok((blk,), x.dtype):
            return self.func(x)

        live = 2 * blk * (in_item + out_item)
        out_flat = pl.pallas_call(
            kernel,
            out_shape=jax.ShapeDtypeStruct((total,), out_dtype),
            grid_spec=pltpu.PrefetchScalarGridSpec(
                num_scalar_prefetch=0,
                grid=grid,
                in_specs=[pl.BlockSpec((blk,), lambda i: (i,))],
                out_specs=pl.BlockSpec((blk,), lambda i: (i,)),
            ),
            compiler_params=pltpu.CompilerParams(
                dimension_semantics=("parallel",),
                vmem_limit_bytes=self._vmem_limit(live),
            ),
            cost_estimate=cost,
        )(flat)
        return out_flat.reshape(x.shape)

    # ------------------------------------------------------------------ #
    def __call__(self, x):
        func = self.func
        # Probe `func` on the real input shape/dtype for the output aval.
        try:
            out_aval = jax.eval_shape(func, jax.ShapeDtypeStruct(x.shape, x.dtype))
        except Exception:
            return func(x)
        if out_aval.shape != tuple(x.shape) or x.size == 0:
            # Shape-changing func: pure data movement, no kernel needed.
            return func(x)

        total = int(x.size)
        out_dtype = out_aval.dtype
        in_item = jnp.dtype(x.dtype).itemsize
        out_item = jnp.dtype(out_dtype).itemsize

        flat = x.reshape(-1)  # effectively free (bitcast) for contiguous arrays

        if total % _LANE == 0:
            return self._run_2d(x, flat, total, out_dtype, in_item, out_item)
        return self._run_1d(x, flat, total, out_dtype, in_item, out_item)


if __name__ == "__main__":
    key = jax.random.PRNGKey(0)

    # Representative elementwise `func` (activation-style lambda).
    func = lambda t: t * jax.nn.sigmoid(t)  # SiLU-like lambda
    model = PallasLambda(func)

    # Primary check: small NCHW input consistent with the example pipeline.
    x = jax.random.normal(key, (2, 4, 16, 16), dtype=jnp.float32)
    y = jax.block_until_ready(model(x))
    ref = func(x)
    assert y.shape == x.shape and y.dtype == ref.dtype
    assert jnp.allclose(y, ref, atol=1e-6, rtol=1e-6)

    k1, k2, k3 = jax.random.split(key, 3)

    # Small unaligned size: single whole-array 1-D block (no pad, no slice).
    x_odd = jax.random.normal(k1, (3, 5, 17, 19), dtype=jnp.float32)
    y_odd = jax.block_until_ready(model(x_odd))
    assert jnp.allclose(y_odd, func(x_odd), atol=1e-6, rtol=1e-6)

    # Larger aligned input: tiled lane-dense 2-D path with a multi-step grid.
    x_big = jax.random.normal(k2, (4, 64, 64, 64), dtype=jnp.float32)
    y_big = jax.block_until_ready(model(x_big))
    assert jnp.allclose(y_big, func(x_big), atol=1e-6, rtol=1e-6)

    # Larger unaligned input: tiled 1-D path with a ragged, Pallas-masked
    # final block (the pad/slice-free path from the perf feedback).
    x_rag = jax.random.normal(k3, (1023, 1025), dtype=jnp.float32)
    y_rag = jax.block_until_ready(model(x_rag))
    assert jnp.allclose(y_rag, func(x_rag), atol=1e-6, rtol=1e-6)

    # Shape-changing func falls back to plain JAX (data movement only).
    flat_model = PallasLambda(lambda t: t.reshape(t.shape[0], -1))
    yf = jax.block_until_ready(flat_model(x))
    assert yf.shape == (2, 4 * 16 * 16)

    print("KERNEL_OK")
</pallas_src>

<mosaic_0001>
module attributes {stable_mosaic.version = 11 : i64} {
  func.func @_lambda_kernel(%arg0: memref<1x2048xf32, #tpu.memory_space<vmem>>, %arg1: memref<1x2048xf32, #tpu.memory_space<vmem>>) attributes {dimension_semantics = [], scalar_prefetch = 0 : i64, scratch_operands = 0 : i64, tpu.core_type = #tpu.core_type<tc>} {
    %c0 = arith.constant 0 : index
    %c0_0 = arith.constant 0 : index
    %0 = vector.load %arg0[%c0, %c0_0] : memref<1x2048xf32, #tpu.memory_space<vmem>>, vector<1x2048xf32>
    %1 = arith.negf %0 : vector<1x2048xf32>
    %2 = math.exp %1 : vector<1x2048xf32>
    %cst = arith.constant 1.000000e+00 : f32
    %3 = vector.broadcast %cst : f32 to vector<1x2048xf32>
    %4 = arith.addf %3, %2 : vector<1x2048xf32>
    %5 = arith.divf %3, %4 : vector<1x2048xf32>
    %6 = arith.mulf %0, %5 : vector<1x2048xf32>
    %c0_1 = arith.constant 0 : index
    %c0_2 = arith.constant 0 : index
    %7 = vector.load %arg1[%c0_1, %c0_2] : memref<1x2048xf32, #tpu.memory_space<vmem>>, vector<1x2048xf32>
    tpu.vector_store %arg1[%c0_1, %c0_2], %6 {strides = array<i32>} : memref<1x2048xf32, #tpu.memory_space<vmem>>, vector<1x2048xf32>,
    return
  }
}

</mosaic_0001>

<llo_original>
// kernel: tpu_custom_call.1
$region0: #{tpu_custom_call.1}
  #allocation0 [shape = 'u32[]', space=smem, size = 0x4, offset = 0x4, fixed_abs, tag = 'smem constant byte address 0x4 - core index']
  #allocation1 [shape = 'u32[144,128]{1,0:T(1,128)}', space=vmem, size = 0x12000, scoped, tag = 'internal scratch']
  %s0 = inlined_call_operand.hbm [shape: f32[1,2048], index: 0, kind: input, shape index: {}]
  %s1 = inlined_call_operand.hbm [shape: f32[1,2048], index: 1, kind: output, shape index: {}]
  %s2 = sld [smem:[#allocation0]]
  $region18: #{tpu_custom_call.1} parent=0
    _
  %s4 = ssub.s32 1, %s2
  %s5 = scalar_select 0, %s4, %s2
  $region1: #{tpu_custom_call.1} parent=0
    #allocation2 [shape = 'u8[8192]{0}', space=vmem, size = 0x2000, scoped, tag = 'input window, operand 0, single buffered']
    #allocation3 [shape = 's32[1]{0}', space=sflag, size = 0x4, scoped, tag = 'scoped memory for tpu_custom_call.1']
    #allocation4 [shape = 's32[1]{0}', space=sflag, size = 0x4, scoped, tag = 'scoped memory for tpu_custom_call.1']
    #allocation5 [shape = 'u8[8192]{0}', space=vmem, size = 0x2000, scoped, tag = 'output window, operand 0, single buffered']
    %6 = vsyncpa [#allocation3], 0
    %7 = vsyncpa [#allocation4], 0
    // Predicated region
    $region2: #{tpu_custom_call.1} parent=1 // pred_check
      _
    $region3: #{tpu_custom_call.1} parent=1 // pred_check_branch
      %9 = sbr.rel (0) target = $region5
    $region4: #{tpu_custom_call.1} parent=1 // pred_region
      %s11 = ssub.s32 256, 256
      %12 = vsyncadd [#allocation3], %s11
      %s14 = sshll.u32 [#allocation2], 4
      %s15 = int_to_ptr.vmem [resolvable:$true] %s14
      %17 = dma.hbm_to_vmem [thread:$0]  %s0, 256, %s15, [#allocation3]
    $region5: #{tpu_custom_call.1} parent=1 // pred_fallthru
      _
    // Predicated region
    $region6: #{tpu_custom_call.1} parent=1 // pred_check
      _
    $region7: #{tpu_custom_call.1} parent=1 // pred_check_branch
      %19 = sbr.rel (0) target = $region9
    $region8: #{tpu_custom_call.1} parent=1 // pred_region
      %20 = dma.done [#allocation3], 256
    $region9: #{tpu_custom_call.1} parent=1 // pred_fallthru
      _
    %v21 = vld [vmem:[#allocation2] sm:$0xff]
    %v22 = vld [vmem:[#allocation2 + $0x8] sm:$0xff]
    %v23 = vxor.u32 %v21, 2147483648
    %v24 = vxor.u32 %v22, 2147483648
    %v25 = vmul.f32 %v23, 1.442695
    %v26 = vpow.pop %v25
    %v27 = vmul.f32 %v24, 1.442695
    %v28 = vpow.pop %v27
    %v29 = vadd.f32 %v26, 1.0
    %v30 = vadd.f32 %v28, 1.0
    %v31 = vrcp.pop %v29
    %v32 = vmul.f32 1.0, %v31
    %v33 = vrcp.pop %v30
    %v34 = vmul.f32 1.0, %v33
    %v35 = vmul.f32 %v21, %v32
    %v36 = vmul.f32 %v22, %v34
    %37 = vst [vmem:[#allocation5] sm:$0xff] %v35
    %38 = vst [vmem:[#allocation5 + $0x8] sm:$0xff] %v36
    // Predicated region
    $region10: #{tpu_custom_call.1} parent=1 // pred_check
      _
    $region11: #{tpu_custom_call.1} parent=1 // pred_check_branch
      %40 = sbr.rel (0) target = $region13
    $region12: #{tpu_custom_call.1} parent=1 // pred_region
      %s42 = ssub.s32 256, 256
      %43 = vsyncadd [#allocation4], %s42
      %s45 = sshll.u32 [#allocation5], 4
      %s46 = int_to_ptr.vmem [resolvable:$true] %s45
      %48 = dma.vmem_to_hbm [thread:$0]  %s46, 256, %s1, [#allocation4]
    $region13: #{tpu_custom_call.1} parent=1 // pred_fallthru
      _
    // Predicated region
    $region14: #{tpu_custom_call.1} parent=1 // pred_check
      _
    $region15: #{tpu_custom_call.1} parent=1 // pred_check_branch
      %50 = sbr.rel (0) target = $region17
    $region16: #{tpu_custom_call.1} parent=1 // pred_region
      %51 = dma.done [#allocation4], 256
    $region17: #{tpu_custom_call.1} parent=1 // pred_fallthru
      _
    %52 = vsyncpa [#allocation3], 1
    %53 = vsyncpa [#allocation4], 1

</llo_original>
